<compile_context>
chip_gen: v6e
topology: v6e:2x2x1
jax: 0.10.0
libtpu: 0.0.40
codegen_flags: <defaults>
</compile_context>

<pallas_src>
import functools
import math

import jax
import jax.numpy as jnp
from jax.experimental import pallas as pl
from jax.experimental.pallas import tpu as pltpu


def _pe_add_dense_kernel(x_ref, pe_ref, o_ref):
    """All refs are (tile_s, B*D): single full-width, lane-dense add/store."""
    o_ref[...] = x_ref[...] + pe_ref[...]


def _pe_add_aligned_kernel(x_ref, pe_ref, o_ref, *, batch: int, d_model: int):
    """x_ref/o_ref: (tile_s, B*D); pe_ref: (tile_s, D) with D % 128 == 0.

    Each per-batch column group starts at a static, 128-aligned lane offset, so
    every store is an unmasked lane-dense vst.  pe_ref is re-read per use (no
    hoisted copy) so the scheduler feeds the store slots from the load slots
    without spilling a large hoisted tile.
    """
    # TODO(synk): for very large batch counts use a bounded-unroll
    #             lax.fori_loop instead of a full Python unroll.
    for b in range(batch):
        col = pl.ds(b * d_model, d_model)  # static, 128-aligned start
        o_ref[:, col] = x_ref[:, col] + pe_ref[...]


def make_pe_table(d_model: int, max_len: int = 128, dtype=jnp.float32):
    """Sinusoidal positional-encoding table, shape [max_len, 1, d_model]."""
    position = jnp.arange(max_len, dtype=jnp.float32)[:, None]
    div_term = jnp.exp(jnp.arange(0, d_model, 2, dtype=jnp.float32)
                       * (-math.log(10000.0) / d_model))
    pe = jnp.zeros((max_len, d_model), dtype=jnp.float32)
    pe = pe.at[:, 0::2].set(jnp.sin(position * div_term))
    pe = pe.at[:, 1::2].set(jnp.cos(position * div_term))
    return pe[:, None, :].astype(dtype)  # [max_len, 1, d_model]


def _choose_tile_s(seq_len: int, row_bytes: int, itemsize: int,
                   target_block_bytes: int = 2 << 20,
                   min_grid_steps: int = 4) -> int:
    """~2 MiB x blocks, sublane-aligned, with a floor on the number of grid
    steps so the DMA pipeline overlaps (and v7x's two TCs both get work)."""
    sub = {4: 8, 2: 16, 1: 32}.get(itemsize, 8)  # sublane packing multiple
    t = max(sub, (target_block_bytes // max(row_bytes, 1)) // sub * sub)
    # Cap tile_s so there are >= min_grid_steps steps whenever S is big enough.
    per_step = pl.cdiv(seq_len, min_grid_steps)
    cap = max(sub, ((per_step + sub - 1) // sub) * sub)
    t = min(t, cap)
    # Full extent is always a legal block shape (covers tiny / unaligned S).
    return seq_len if t >= seq_len else t


def positional_encoding(x: jax.Array, pe: jax.Array, *,
                        tile_s: int | None = None,
                        donate_x: bool = False) -> jax.Array:
    """x: [S, B, D], pe: [max_len, 1, D]  ->  x + pe[:S]  (broadcast over B)."""
    S, B, D = x.shape
    assert pe.shape[0] >= S and pe.shape[-1] == D

    itemsize = jnp.dtype(x.dtype).itemsize
    x2 = x.reshape(S, B * D)                    # lane-dense view of x (free)
    pe_sd = pe[:S, 0, :].astype(x.dtype)        # [S, D]
    # TODO(synk): PyTorch adds the f32 pe buffer (promoting bf16 x to f32);
    #             here the add is done in x.dtype to preserve x's dtype.

    # Pick the lane-dense store strategy.
    aligned = (D % 128 == 0) and (B > 1)
    if aligned:
        pe_op = pe_sd                                           # [S, D]
        kernel = functools.partial(_pe_add_aligned_kernel, batch=B, d_model=D)
        pe_cols = D
    else:
        pe_op = pe_sd if B == 1 else jnp.tile(pe_sd, (1, B))    # [S, B*D]
        kernel = _pe_add_dense_kernel
        pe_cols = B * D

    if tile_s is None:
        tile_s = _choose_tile_s(S, B * D * itemsize, itemsize)
    grid = (pl.cdiv(S, tile_s),)

    cost = pl.CostEstimate(
        flops=S * B * D,
        transcendentals=0,
        bytes_accessed=(2 * S * B * D + S * pe_cols) * itemsize,
    )

    out2 = pl.pallas_call(
        kernel,
        out_shape=jax.ShapeDtypeStruct((S, B * D), x.dtype),
        grid=grid,
        in_specs=[
            pl.BlockSpec((tile_s, B * D), lambda i: (i, 0)),    # x tile
            pl.BlockSpec((tile_s, pe_cols), lambda i: (i, 0)),  # pe tile
        ],
        out_specs=pl.BlockSpec((tile_s, B * D), lambda i: (i, 0)),
        compiler_params=pltpu.CompilerParams(
            dimension_semantics=("parallel",),        # no cross-step carry
            vmem_limit_bytes=32 * 1024 * 1024,        # headroom on v5e's 16 MiB default
        ),
        cost_estimate=cost,
        input_output_aliases={0: 0} if donate_x else {},
    )(x2, pe_op)

    return out2.reshape(S, B, D)


if __name__ == "__main__":
    key = jax.random.PRNGKey(0)
    k1, k2, k3 = jax.random.split(key, 3)
    max_len = 128

    # --- Case 1: spec shapes, D not a multiple of 128 -> broadcast-pe path. ---
    S1, B1, D1 = 8, 2, 32
    x1 = jax.random.normal(k1, (S1, B1, D1), dtype=jnp.float32)
    pe1 = make_pe_table(D1, max_len=max_len)
    out1 = jax.block_until_ready(positional_encoding(x1, pe1))
    ref1 = x1 + pe1[:S1]
    assert out1.shape == (S1, B1, D1)
    assert jnp.allclose(out1, ref1, atol=1e-6), "mismatch vs reference (case 1)"

    # --- Case 2: forced multi-step grid, D % 128 == 0 -> aligned-slice path. ---
    S2, B2, D2 = 48, 4, 128
    x2 = jax.random.normal(k2, (S2, B2, D2), dtype=jnp.float32)
    pe2 = make_pe_table(D2, max_len=max_len)
    out2 = jax.block_until_ready(positional_encoding(x2, pe2, tile_s=16))  # grid=(3,)
    ref2 = x2 + pe2[:S2]
    assert out2.shape == (S2, B2, D2)
    assert jnp.allclose(out2, ref2, atol=1e-6), "mismatch vs reference (case 2)"

    # --- Case 3: default tiling exercises the grid-steps floor (grid=(4,)). ---
    S3, B3, D3 = 64, 2, 128
    x3 = jax.random.normal(k3, (S3, B3, D3), dtype=jnp.float32)
    pe3 = make_pe_table(D3, max_len=max_len)
    out3 = jax.block_until_ready(positional_encoding(x3, pe3))
    ref3 = x3 + pe3[:S3]
    assert out3.shape == (S3, B3, D3)
    assert jnp.allclose(out3, ref3, atol=1e-6), "mismatch vs reference (case 3)"

    print("KERNEL_OK")
</pallas_src>

<mosaic_0001>
module attributes {stable_mosaic.version = 11 : i64} {
  func.func @_pe_add_dense_kernel(%arg0: i32, %arg1: memref<8x64xf32, #tpu.memory_space<vmem>>, %arg2: memref<8x64xf32, #tpu.memory_space<vmem>>, %arg3: memref<8x64xf32, #tpu.memory_space<vmem>>) attributes {dimension_semantics = [#tpu.dimension_semantics<parallel>], iteration_bounds = array<i64: 1>, scalar_prefetch = 0 : i64, scratch_operands = 0 : i64, tpu.core_type = #tpu.core_type<tc>, window_params = [{transform_indices = @transform_0, window_bounds = array<i64: 8, 64>}, {transform_indices = @transform_1, window_bounds = array<i64: 8, 64>}, {transform_indices = @transform_2, window_bounds = array<i64: 8, 64>}]} {
    %c0 = arith.constant 0 : index
    %c0_0 = arith.constant 0 : index
    %0 = vector.load %arg1[%c0, %c0_0] : memref<8x64xf32, #tpu.memory_space<vmem>>, vector<8x64xf32>
    %c0_1 = arith.constant 0 : index
    %c0_2 = arith.constant 0 : index
    %1 = vector.load %arg2[%c0_1, %c0_2] : memref<8x64xf32, #tpu.memory_space<vmem>>, vector<8x64xf32>
    %2 = arith.addf %0, %1 : vector<8x64xf32>
    %c0_3 = arith.constant 0 : index
    %c0_4 = arith.constant 0 : index
    %3 = vector.load %arg3[%c0_3, %c0_4] : memref<8x64xf32, #tpu.memory_space<vmem>>, vector<8x64xf32>
    tpu.vector_store %arg3[%c0_3, %c0_4], %2 {strides = array<i32>} : memref<8x64xf32, #tpu.memory_space<vmem>>, vector<8x64xf32>,
    return
  }
  func.func @transform_0(%arg0: i32) -> (i32, i32) {
    %c0_i32 = arith.constant 0 : i32
    %c0_i32_0 = arith.constant 0 : i32
    return %arg0, %c0_i32 : i32, i32
  }
  func.func @transform_1(%arg0: i32) -> (i32, i32) {
    %c0_i32 = arith.constant 0 : i32
    %c0_i32_0 = arith.constant 0 : i32
    return %arg0, %c0_i32 : i32, i32
  }
  func.func @transform_2(%arg0: i32) -> (i32, i32) {
    %c0_i32 = arith.constant 0 : i32
    %c0_i32_0 = arith.constant 0 : i32
    return %arg0, %c0_i32 : i32, i32
  }
}

</mosaic_0001>

<llo_original>
// kernel: tpu_custom_call.1
$region0: #{tpu_custom_call.1}
  #allocation0 [shape = 'u32[]', space=smem, size = 0x4, offset = 0x4, fixed_abs, tag = 'smem constant byte address 0x4 - core index']
  #allocation1 [shape = 'u32[144,128]{1,0:T(1,128)}', space=vmem, size = 0x12000, scoped, tag = 'internal scratch']
  %s0 = inlined_call_operand.hbm [shape: f32[8,64], index: 0, kind: input, shape index: {}]
  %s1 = inlined_call_operand.hbm [shape: f32[8,64], index: 1, kind: input, shape index: {}]
  %s2 = inlined_call_operand.hbm [shape: f32[8,64], index: 2, kind: output, shape index: {}]
  %s3 = sld [smem:[#allocation0]]
  $region26: #{tpu_custom_call.1} parent=0
    _
  %s5 = ssub.s32 1, %s3
  %s6 = scalar_select 0, %s5, %s3
  $region1: #{tpu_custom_call.1} parent=0
    #allocation2 [shape = 'u8[4096]{0}', space=vmem, size = 0x1000, scoped, tag = 'input window, operand 0, single buffered']
    #allocation3 [shape = 's32[1]{0}', space=sflag, size = 0x4, scoped, tag = 'scoped memory for tpu_custom_call.1']
    #allocation4 [shape = 's32[1]{0}', space=sflag, size = 0x4, scoped, tag = 'scoped memory for tpu_custom_call.1']
    #allocation5 [shape = 'u8[4096]{0}', space=vmem, size = 0x1000, scoped, tag = 'input window, operand 1, single buffered']
    #allocation6 [shape = 's32[1]{0}', space=sflag, size = 0x4, scoped, tag = 'scoped memory for tpu_custom_call.1']
    #allocation7 [shape = 'u8[4096]{0}', space=vmem, size = 0x1000, scoped, tag = 'output window, operand 0, single buffered']
    %7 = vsyncpa [#allocation3], 0
    %8 = vsyncpa [#allocation6], 0
    %9 = vsyncpa [#allocation4], 0
    // Predicated region
    $region2: #{tpu_custom_call.1} parent=1 // pred_check
      _
    $region3: #{tpu_custom_call.1} parent=1 // pred_check_branch
      %11 = sbr.rel (0) target = $region5
    $region4: #{tpu_custom_call.1} parent=1 // pred_region
      %s13 = ssub.s32 128, 128
      %14 = vsyncadd [#allocation3], %s13
      %s16 = sshll.u32 [#allocation2], 4
      %s17 = int_to_ptr.vmem [resolvable:$true] %s16
      %19 = dma.hbm_to_vmem [thread:$0]  %s0, 128, %s17, [#allocation3]
    $region5: #{tpu_custom_call.1} parent=1 // pred_fallthru
      _
    // Predicated region
    $region6: #{tpu_custom_call.1} parent=1 // pred_check
      _
    $region7: #{tpu_custom_call.1} parent=1 // pred_check_branch
      %21 = sbr.rel (0) target = $region9
    $region8: #{tpu_custom_call.1} parent=1 // pred_region
      %s23 = ssub.s32 128, 128
      %24 = vsyncadd [#allocation6], %s23
      %s26 = sshll.u32 [#allocation5], 4
      %s27 = int_to_ptr.vmem [resolvable:$true] %s26
      %29 = dma.hbm_to_vmem [thread:$0]  %s1, 128, %s27, [#allocation6]
    $region9: #{tpu_custom_call.1} parent=1 // pred_fallthru
      _
    // Predicated region
    $region10: #{tpu_custom_call.1} parent=1 // pred_check
      _
    $region11: #{tpu_custom_call.1} parent=1 // pred_check_branch
      %31 = sbr.rel (0) target = $region13
    $region12: #{tpu_custom_call.1} parent=1 // pred_region
      %32 = dma.done [#allocation3], 128
    $region13: #{tpu_custom_call.1} parent=1 // pred_fallthru
      _
    // Predicated region
    $region14: #{tpu_custom_call.1} parent=1 // pred_check
      _
    $region15: #{tpu_custom_call.1} parent=1 // pred_check_branch
      %34 = sbr.rel (0) target = $region17
    $region16: #{tpu_custom_call.1} parent=1 // pred_region
      %35 = dma.done [#allocation6], 128
    $region17: #{tpu_custom_call.1} parent=1 // pred_fallthru
      _
    %v36 = vld [vmem:[#allocation2] sm:$0xff]
    %v37 = vld [vmem:[#allocation5] sm:$0xff]
    %v38 = vadd.f32 %v36, %v37
    %vm39 = vcmask 523264
    %40 = vst.msk [vmem:[#allocation7] sm:$0xff] %vm39, %v38
    // Predicated region
    $region18: #{tpu_custom_call.1} parent=1 // pred_check
      _
    $region19: #{tpu_custom_call.1} parent=1 // pred_check_branch
      %42 = sbr.rel (0) target = $region21
    $region20: #{tpu_custom_call.1} parent=1 // pred_region
      %s44 = ssub.s32 128, 128
      %45 = vsyncadd [#allocation4], %s44
      %s47 = sshll.u32 [#allocation7], 4
      %s48 = int_to_ptr.vmem [resolvable:$true] %s47
      %50 = dma.vmem_to_hbm [thread:$0]  %s48, 128, %s2, [#allocation4]
    $region21: #{tpu_custom_call.1} parent=1 // pred_fallthru
      _
    // Predicated region
    $region22: #{tpu_custom_call.1} parent=1 // pred_check
      _
    $region23: #{tpu_custom_call.1} parent=1 // pred_check_branch
      %52 = sbr.rel (0) target = $region25
    $region24: #{tpu_custom_call.1} parent=1 // pred_region
      %53 = dma.done [#allocation4], 128
    $region25: #{tpu_custom_call.1} parent=1 // pred_fallthru
      _
    %54 = vsyncpa [#allocation3], 1
    %55 = vsyncpa [#allocation6], 1
    %56 = vsyncpa [#allocation4], 1

</llo_original>
